<compile_context>
chip_gen: v6e
topology: v6e:2x2x1
jax: 0.10.0
libtpu: 0.0.40
codegen_flags: <defaults>
</compile_context>

<pallas_src>
import functools

import jax
import jax.numpy as jnp
from jax import lax
from jax.experimental import pallas as pl
from jax.experimental.pallas import tpu as pltpu

_NH = 2                       # independent "parallel" halves (both TCs on v7x; harmless on 1-TC)
_LANE = 128
_SUBLANE = 8
_TARGET_BLOCK_BYTES = 2 << 20  # ~2 MiB per input block


def _cdiv(a, b):
    return (a + b - 1) // b


def _round_up(x, m):
    return _cdiv(x, m) * m


def _choose_layout(n):
    """Pick lane width W (multiple of 128) and padded per-row length n_pad (multiple of W)."""
    for w in (1024, 512, 256, 128):
        if n % w == 0:
            return w, n
    n_pad = _round_up(n, _LANE)
    for w in (1024, 512, 256, 128):
        if n_pad % w == 0:
            return w, n_pad
    return _LANE, n_pad


def _make_seg_focal_kernel(gamma, alpha, bm, w_lanes, m_rows):
    gamma = float(gamma)
    alpha = float(alpha)

    def kernel(pt_ref, tgt_ref, wt_ref, out_ref, acc_ref):
        h = pl.program_id(0)
        t = pl.program_id(1)
        nt = pl.num_programs(1)

        @pl.when(t == 0)
        def _():
            acc_ref[...] = jnp.zeros_like(acc_ref)

        pt = jnp.clip(pt_ref[...].astype(jnp.float32), 1e-5, 1.0 - 1e-5)
        tgt = tgt_ref[...].astype(jnp.float32)
        one_m_pt = 1.0 - pt
        if gamma == 2.0:          # default: two VPU multiplies, no pow/exp
            pt_g = pt * pt
            ompt_g = one_m_pt * one_m_pt
        else:
            pt_g = pt ** gamma
            ompt_g = one_m_pt ** gamma
        # TODO(synk): if targets were guaranteed binary, a single-log rewrite would halve the
        # EUP work; kept as two logs so soft labels stay numerically faithful to the reference.
        loss = (-alpha * ompt_g * tgt * jnp.log(pt)
                - (1.0 - alpha) * pt_g * (1.0 - tgt) * jnp.log(one_m_pt))
        weighted = loss * wt_ref[...]                       # (bm, 1) lane-broadcast weight

        # Zero rows that are grid over-coverage / partial-block padding (contents unspecified);
        # the select also kills any NaN such garbage could produce.
        row0 = (h * nt + t) * bm
        rows = row0 + lax.broadcasted_iota(jnp.int32, (bm, 1), 0)
        weighted = jnp.where(rows < m_rows, weighted, 0.0)

        # Fold (bm, W) -> (8, W) with static tile-aligned slices: pure VPU vreg adds,
        # no XLU / cross-lane work on the per-step path.
        folded = weighted[0:_SUBLANE, :]
        for i in range(1, bm // _SUBLANE):
            folded = folded + weighted[i * _SUBLANE:(i + 1) * _SUBLANE, :]
        acc_ref[...] += folded

        @pl.when(t == nt - 1)
        def _():
            out_ref[0] = acc_ref[...]

    return kernel


@functools.partial(jax.jit, static_argnames=("gamma", "alpha", "reduction"))
def seg_focal_loss(pt, target, real_ix, fake_ix, gamma=2, alpha=0.25,
                   reduction="elementwise_mean"):
    """pt/target: (B, ...) probabilities / labels; real_ix/fake_ix: (B,) boolean masks."""
    b = pt.shape[0]
    pt2 = pt.reshape(b, -1)          # keep native storage dtypes; cast to f32 inside the kernel
    tgt2 = target.reshape(b, -1)
    n = pt2.shape[1]

    real = real_ix.reshape(b).astype(jnp.float32)
    fake = fake_ix.reshape(b).astype(jnp.float32)
    n_real = jnp.sum(real)
    n_fake = jnp.sum(fake)

    if reduction == "elementwise_mean":
        # term included only if the subset is non-empty; mean over n_rows * N original elements
        real_coef = jnp.where(n_real > 0, 3.0 / (jnp.maximum(n_real, 1.0) * n), 0.0)
        fake_coef = jnp.where(n_fake > 0, 1.0 / (jnp.maximum(n_fake, 1.0) * n), 0.0)
    elif reduction == "sum":
        real_coef = jnp.float32(3.0)
        fake_coef = jnp.float32(1.0)
    else:
        raise ValueError(f"unsupported reduction: {reduction}")
    w_row = real * real_coef + fake * fake_coef            # (b,) per-row weight

    # ---- layout: (b, n) -> (m_rows, w_lanes) sub-rows, full sublane/lane occupancy ----
    w_lanes, n_pad = _choose_layout(n)
    if n_pad != n:
        # pad value 1: clamp -> 1-1e-5, tgt=1 -> ~2.5e-16 loss per padded element (negligible)
        pt2 = jnp.pad(pt2, ((0, 0), (0, n_pad - n)), constant_values=1)
        tgt2 = jnp.pad(tgt2, ((0, 0), (0, n_pad - n)), constant_values=1)
    reps = n_pad // w_lanes
    m_rows = b * reps
    pt_m = pt2.reshape(m_rows, w_lanes)
    tgt_m = tgt2.reshape(m_rows, w_lanes)
    wt = jnp.repeat(w_row, reps).reshape(m_rows, 1)

    if m_rows < _SUBLANE:            # tiny inputs: pad rows (zero weight -> exactly zero loss)
        pad_r = _SUBLANE - m_rows
        pt_m = jnp.pad(pt_m, ((0, pad_r), (0, 0)), constant_values=1)
        tgt_m = jnp.pad(tgt_m, ((0, pad_r), (0, 0)), constant_values=1)
        wt = jnp.pad(wt, ((0, pad_r), (0, 0)))
        m_rows = _SUBLANE

    # ---- block sizes: sublane block bm (multiple of 8), <= ~2 MiB per input block ----
    bm_cap = _round_up(_cdiv(m_rows, _NH), _SUBLANE)
    bm = max(_SUBLANE, min(512, _TARGET_BLOCK_BYTES // (4 * w_lanes), bm_cap))
    bm = (bm // _SUBLANE) * _SUBLANE
    n_blocks = _cdiv(m_rows, bm)
    t_steps = _cdiv(n_blocks, _NH)

    def data_map(hh, tt):
        return (jnp.minimum(hh * t_steps + tt, n_blocks - 1), 0)

    out = pl.pallas_call(
        _make_seg_focal_kernel(gamma, alpha, bm, w_lanes, m_rows),
        out_shape=jax.ShapeDtypeStruct((_NH, _SUBLANE, w_lanes), jnp.float32),
        grid_spec=pltpu.PrefetchScalarGridSpec(
            num_scalar_prefetch=0,
            grid=(_NH, t_steps),
            in_specs=[
                pl.BlockSpec((bm, w_lanes), data_map),
                pl.BlockSpec((bm, w_lanes), data_map),
                pl.BlockSpec((bm, 1), data_map),
            ],
            out_specs=pl.BlockSpec((1, _SUBLANE, w_lanes), lambda hh, tt: (hh, 0, 0)),
            scratch_shapes=[pltpu.VMEM((_SUBLANE, w_lanes), jnp.float32)],
        ),
        compiler_params=pltpu.CompilerParams(
            dimension_semantics=("parallel", "arbitrary")),
    )(pt_m, tgt_m, wt)

    return jnp.sum(out)   # tiny (2, 8, W) partial-sum slab -> scalar


class SegFocalLossJAX:
    """Mirror of the PyTorch SegFocalLoss module."""

    def __init__(self, gamma=2, alpha=0.25, reduction="elementwise_mean"):
        self.gamma = gamma
        self.alpha = alpha
        self.reduction = reduction

    def __call__(self, pt, target, real_ix, fake_ix):
        return seg_focal_loss(pt, target, real_ix, fake_ix,
                              gamma=self.gamma, alpha=self.alpha,
                              reduction=self.reduction)


if __name__ == "__main__":
    key = jax.random.PRNGKey(0)
    k1, k2 = jax.random.split(key)

    B, C, H, W = 2, 4, 16, 16
    pt = jax.nn.sigmoid(jax.random.normal(k1, (B, C, H, W), dtype=jnp.float32))
    target = (jax.random.uniform(k2, (B, C, H, W)) > 0.5).astype(jnp.float32)
    real_ix = jnp.array([True, False])
    fake_ix = jnp.array([False, True])

    loss_mod = SegFocalLossJAX()
    result = loss_mod(pt, target, real_ix, fake_ix)
    jax.block_until_ready(result)

    # Reference in plain JAX (same math as the PyTorch forward).
    alpha, gamma = 0.25, 2
    pt2 = jnp.clip(pt.reshape(B, -1), 1e-5, 1.0 - 1e-5)
    tgt2 = target.reshape(B, -1)
    loss_el = (-alpha * (1.0 - pt2) ** gamma * tgt2 * jnp.log(pt2)
               - (1.0 - alpha) * pt2 ** gamma * (1.0 - tgt2) * jnp.log(1.0 - pt2))
    N = loss_el.shape[1]
    real_f = real_ix.astype(jnp.float32)[:, None]
    fake_f = fake_ix.astype(jnp.float32)[:, None]
    n_real = int(jnp.sum(real_ix))
    n_fake = int(jnp.sum(fake_ix))
    ref = 0.0
    if n_real > 0:
        ref += 3.0 * float(jnp.sum(loss_el * real_f)) / (n_real * N)
    if n_fake > 0:
        ref += float(jnp.sum(loss_el * fake_f)) / (n_fake * N)

    assert jnp.allclose(result, jnp.float32(ref), rtol=1e-4, atol=1e-7), (float(result), ref)
    print("KERNEL_OK")
</pallas_src>

<mosaic_0001>
module attributes {stable_mosaic.version = 11 : i64} {
  func.func @kernel(%arg0: i32, %arg1: i32, %arg2: memref<8x1024xf32, #tpu.memory_space<vmem>>, %arg3: memref<8x1024xf32, #tpu.memory_space<vmem>>, %arg4: memref<8x1xf32, #tpu.memory_space<vmem>>, %arg5: memref<1x8x1024xf32, #tpu.memory_space<vmem>>, %arg6: memref<8x1024xf32, #tpu.memory_space<vmem>>) attributes {dimension_semantics = [#tpu.dimension_semantics<parallel>, #tpu.dimension_semantics<arbitrary>], iteration_bounds = array<i64: 2, 1>, scalar_prefetch = 0 : i64, scratch_operands = 1 : i64, tpu.core_type = #tpu.core_type<tc>, window_params = [{transform_indices = @transform_0, window_bounds = array<i64: 8, 1024>}, {transform_indices = @transform_1, window_bounds = array<i64: 8, 1024>}, {transform_indices = @transform_2, window_bounds = array<i64: 8, 1>}, {transform_indices = @transform_3, window_bounds = array<i64: 1, 8, 1024>}]} {
    %c0_i32 = arith.constant 0 : i32
    %0 = arith.cmpi eq, %arg1, %c0_i32 : i32
    %1 = arith.extui %0 : i1 to i32
    %c0_i32_0 = arith.constant 0 : i32
    %2 = arith.cmpi ne, %1, %c0_i32_0 : i32
    scf.if %2 {
      %cst_19 = arith.constant 0.000000e+00 : f32
      %47 = vector.broadcast %cst_19 : f32 to vector<8x1024xf32>
      %c0_20 = arith.constant 0 : index
      %c0_21 = arith.constant 0 : index
      %48 = vector.load %arg6[%c0_20, %c0_21] : memref<8x1024xf32, #tpu.memory_space<vmem>>, vector<8x1024xf32>
      tpu.vector_store %arg6[%c0_20, %c0_21], %47 {strides = array<i32>} : memref<8x1024xf32, #tpu.memory_space<vmem>>, vector<8x1024xf32>,
    } else {
    }
    %c0 = arith.constant 0 : index
    %c0_1 = arith.constant 0 : index
    %3 = vector.load %arg2[%c0, %c0_1] : memref<8x1024xf32, #tpu.memory_space<vmem>>, vector<8x1024xf32>
    %cst = arith.constant 9.99999974E-6 : f32
    %cst_2 = arith.constant 0.999989986 : f32
    %4 = vector.broadcast %cst : f32 to vector<8x1024xf32>
    %5 = arith.maximumf %4, %3 : vector<8x1024xf32>
    %6 = vector.broadcast %cst_2 : f32 to vector<8x1024xf32>
    %7 = arith.minimumf %6, %5 : vector<8x1024xf32>
    %c0_3 = arith.constant 0 : index
    %c0_4 = arith.constant 0 : index
    %8 = vector.load %arg3[%c0_3, %c0_4] : memref<8x1024xf32, #tpu.memory_space<vmem>>, vector<8x1024xf32>
    %cst_5 = arith.constant 1.000000e+00 : f32
    %9 = vector.broadcast %cst_5 : f32 to vector<8x1024xf32>
    %10 = arith.subf %9, %7 : vector<8x1024xf32>
    %11 = arith.mulf %7, %7 : vector<8x1024xf32>
    %12 = arith.mulf %10, %10 : vector<8x1024xf32>
    %cst_6 = arith.constant -2.500000e-01 : f32
    %13 = vector.broadcast %cst_6 : f32 to vector<8x1024xf32>
    %14 = arith.mulf %13, %12 : vector<8x1024xf32>
    %15 = arith.mulf %14, %8 : vector<8x1024xf32>
    %16 = math.log %7 : vector<8x1024xf32>
    %17 = arith.mulf %15, %16 : vector<8x1024xf32>
    %cst_7 = arith.constant 7.500000e-01 : f32
    %18 = vector.broadcast %cst_7 : f32 to vector<8x1024xf32>
    %19 = arith.mulf %18, %11 : vector<8x1024xf32>
    %cst_8 = arith.constant 1.000000e+00 : f32
    %20 = vector.broadcast %cst_8 : f32 to vector<8x1024xf32>
    %21 = arith.subf %20, %8 : vector<8x1024xf32>
    %22 = arith.mulf %19, %21 : vector<8x1024xf32>
    %23 = math.log %10 : vector<8x1024xf32>
    %24 = arith.mulf %22, %23 : vector<8x1024xf32>
    %25 = arith.subf %17, %24 : vector<8x1024xf32>
    %c0_9 = arith.constant 0 : index
    %c0_10 = arith.constant 0 : index
    %26 = vector.load %arg4[%c0_9, %c0_10] : memref<8x1xf32, #tpu.memory_space<vmem>>, vector<8x1xf32>
    %27 = vector.broadcast %26 : vector<8x1xf32> to vector<8x1024xf32>
    %28 = arith.mulf %25, %27 : vector<8x1024xf32>
    %c1_i32 = arith.constant 1 : i32
    %29 = arith.muli %arg0, %c1_i32 : i32
    %30 = arith.addi %29, %arg1 : i32
    %c8_i32 = arith.constant 8 : i32
    %31 = arith.muli %30, %c8_i32 : i32
    %32 = tpu.iota {dimensions = array<i32: 0>} : vector<8x1xi32>
    %33 = vector.broadcast %31 : i32 to vector<8x1xi32>
    %34 = arith.addi %33, %32 : vector<8x1xi32>
    %c8_i32_11 = arith.constant 8 : i32
    %35 = vector.broadcast %c8_i32_11 : i32 to vector<8x1xi32>
    %36 = arith.cmpi slt, %34, %35 : vector<8x1xi32>
    %cst_12 = arith.constant 0.000000e+00 : f32
    %37 = vector.shape_cast %36 : vector<8x1xi1> to vector<8x1xi1>
    %38 = vector.broadcast %37 : vector<8x1xi1> to vector<8x1024xi1>
    %39 = vector.broadcast %cst_12 : f32 to vector<8x1024xf32>
    %40 = arith.select %38, %28, %39 : vector<8x1024xi1>, vector<8x1024xf32>
    %c0_13 = arith.constant 0 : index
    %c0_14 = arith.constant 0 : index
    %41 = vector.load %arg6[%c0_13, %c0_14] : memref<8x1024xf32, #tpu.memory_space<vmem>>, vector<8x1024xf32>
    %42 = arith.addf %41, %40 : vector<8x1024xf32>
    %c0_15 = arith.constant 0 : index
    %c0_16 = arith.constant 0 : index
    %43 = vector.load %arg6[%c0_15, %c0_16] : memref<8x1024xf32, #tpu.memory_space<vmem>>, vector<8x1024xf32>
    tpu.vector_store %arg6[%c0_15, %c0_16], %42 {strides = array<i32>} : memref<8x1024xf32, #tpu.memory_space<vmem>>, vector<8x1024xf32>,
    %c0_i32_17 = arith.constant 0 : i32
    %44 = arith.cmpi eq, %arg1, %c0_i32_17 : i32
    %45 = arith.extui %44 : i1 to i32
    %c0_i32_18 = arith.constant 0 : i32
    %46 = arith.cmpi ne, %45, %c0_i32_18 : i32
    scf.if %46 {
      %c0_19 = arith.constant 0 : index
      %c0_20 = arith.constant 0 : index
      %47 = vector.load %arg6[%c0_19, %c0_20] : memref<8x1024xf32, #tpu.memory_space<vmem>>, vector<8x1024xf32>
      %c0_21 = arith.constant 0 : index
      %c0_22 = arith.constant 0 : index
      %c0_23 = arith.constant 0 : index
      %48 = vector.load %arg5[%c0_21, %c0_22, %c0_23] : memref<1x8x1024xf32, #tpu.memory_space<vmem>>, vector<1x8x1024xf32>
      %49 = vector.shape_cast %48 : vector<1x8x1024xf32> to vector<8x1024xf32>
      %50 = vector.shape_cast %47 : vector<8x1024xf32> to vector<1x8x1024xf32>
      tpu.vector_store %arg5[%c0_21, %c0_22, %c0_23], %50 {strides = array<i32>} : memref<1x8x1024xf32, #tpu.memory_space<vmem>>, vector<1x8x1024xf32>,
    } else {
    }
    return
  }
  func.func @transform_0(%arg0: i32, %arg1: i32) -> (i32, i32) {
    %c1_i32 = arith.constant 1 : i32
    %0 = arith.muli %arg0, %c1_i32 : i32
    %1 = arith.addi %0, %arg1 : i32
    %c0_i32 = arith.constant 0 : i32
    %2 = arith.minsi %1, %c0_i32 : i32
    %c0_i32_0 = arith.constant 0 : i32
    %c0_i32_1 = arith.constant 0 : i32
    return %2, %c0_i32_0 : i32, i32
  }
  func.func @transform_1(%arg0: i32, %arg1: i32) -> (i32, i32) {
    %c1_i32 = arith.constant 1 : i32
    %0 = arith.muli %arg0, %c1_i32 : i32
    %1 = arith.addi %0, %arg1 : i32
    %c0_i32 = arith.constant 0 : i32
    %2 = arith.minsi %1, %c0_i32 : i32
    %c0_i32_0 = arith.constant 0 : i32
    %c0_i32_1 = arith.constant 0 : i32
    return %2, %c0_i32_0 : i32, i32
  }
  func.func @transform_2(%arg0: i32, %arg1: i32) -> (i32, i32) {
    %c1_i32 = arith.constant 1 : i32
    %0 = arith.muli %arg0, %c1_i32 : i32
    %1 = arith.addi %0, %arg1 : i32
    %c0_i32 = arith.constant 0 : i32
    %2 = arith.minsi %1, %c0_i32 : i32
    %c0_i32_0 = arith.constant 0 : i32
    %c0_i32_1 = arith.constant 0 : i32
    return %2, %c0_i32_0 : i32, i32
  }
  func.func @transform_3(%arg0: i32, %arg1: i32) -> (i32, i32, i32) {
    %c0_i32 = arith.constant 0 : i32
    %c0_i32_0 = arith.constant 0 : i32
    %c0_i32_1 = arith.constant 0 : i32
    return %arg0, %c0_i32, %c0_i32_0 : i32, i32, i32
  }
}

</mosaic_0001>

<llo_original>
// kernel: seg_focal_loss.1
$region0: #{seg_focal_loss.1}
  #allocation0 [shape = 'u32[]', space=smem, size = 0x4, offset = 0x4, fixed_abs, tag = 'smem constant byte address 0x4 - core index']
  #allocation1 [shape = 'u32[144,128]{1,0:T(1,128)}', space=vmem, size = 0x12000, scoped, tag = 'internal scratch']
  #allocation2 [shape = 'f32[8,1024]{1,0:T(8,128)}', space=vmem, size = 0x8000, scoped, tag = 'scratch operand']
  %s0 = inlined_call_operand.vmem [shape: f32[8,1024], index: 0, kind: input, shape index: {}]
  %s1 = inlined_call_operand.vmem [shape: f32[8,1024], index: 1, kind: input, shape index: {}]
  %s2 = inlined_call_operand.vmem [shape: f32[8,1], index: 2, kind: input, shape index: {}]
  %s3 = inlined_call_operand.vmem [shape: f32[2,8,1024], index: 3, kind: output, shape index: {}]
  %s4 = sld [smem:[#allocation0]]
  $region53: #{seg_focal_loss.1} parent=0
    _
  %s6 = ssub.s32 1, %s4
  %s7 = scalar_select 0, %s6, %s4
  loop: start=0, step=1, limit=4
  $region2: #{seg_focal_loss.1} parent=0 // loop_pre_header
    _
  $region3: #{seg_focal_loss.1} parent=0 // loop_header
    %s9 = sphi 0, %s13
    %p10 = scmp.ge.s32.totalorder %s9, 4
    %s16 = sphi 0, %s28
    %s17 = sphi 0, %s24
    %s18 = sphi 0, %s16
    %s19 = sphi 0, %s17
    %s20 = sphi 0, %s18
    %s21 = sphi 0, %s19
    %s37 = sphi 0, %s39
    %s40 = sphi 0, %s37
    %s41 = sphi 0, %s40
    %s57 = sphi 0, %s41
    %s69 = sphi 0, %s71
    %s72 = sphi 0, %s69
    %s73 = sphi 0, %s72
    %s89 = sphi 0, %s73
    %s101 = sphi 0, %s103
    %s104 = sphi 0, %s101
    %s105 = sphi 0, %s104
    %s121 = sphi 0, %s105
    %s127 = sphi 0, %s129
    %s130 = sphi 0, %s127
    %s131 = sphi 0, %s130
    %s147 = sphi 0, %s131
  $region4: #{seg_focal_loss.1} parent=0 // loop_header_branch
    %12 = sbr.rel (%p10) target = $region8
  $region5: #{seg_focal_loss.1} parent=0 // loop_body
    %s14 = ssub.s32 %s9, 1
    %s15 = ssub.s32 %s9, 2
    %s22 = sadd.s32 1, %s17
    %p23 = scmp.ge.s32.totalorder %s22, 1
    %s24 = scalar_select %p23, 0, %s22
    %s25 = sadd.s32 1, %s16
    %s26 = scalar_select %p23, %s25, %s16
    %p27 = scmp.ge.s32.totalorder %s26, 2
    %s28 = scalar_select %p27, 0, %s26
    %s29 = sadd.s32 %s16, %s17
    %p30 = scmp.lt.s32.totalorder %s29, 0
    %s31 = scalar_select %p30, %s29, 0
    %s32 = sadd.s32 %s28, %s24
    %p33 = scmp.lt.s32.totalorder %s32, 0
    %s34 = scalar_select %p33, %s32, 0
    %s35 = ssub.s32 %s31, %s34
    %p36 = scmp.eq.s32.totalorder %s35, 0
    %s38 = sadd.s32 %s37, 1
    %s39 = scalar_select %p36, %s37, %s38
    %p42 = pneg %p36
    %p43 = scmp.eq.s32.totalorder %s9, 1
    %p44 = por %p42, %p43
    %p45 = scmp.ne.s32.totalorder %s37, %s40
    %p46 = scmp.eq.s32.totalorder %s9, 0
    %p47 = por %p45, %p46
    %p48 = scmp.ne.s32.totalorder %s37, %s40
    %p49 = scmp.eq.s32.totalorder %s14, 1
    %p50 = por %p48, %p49
    %p51 = scmp.ne.s32.totalorder %s40, %s41
    %p52 = scmp.eq.s32.totalorder %s14, 0
    %p53 = por %p51, %p52
    %p54 = scmp.ne.s32.totalorder %s40, %s41
    %p55 = scmp.eq.s32.totalorder %s15, 1
    %p56 = por %p54, %p55
    %p58 = scmp.ne.s32.totalorder %s41, %s57
    %p59 = scmp.eq.s32.totalorder %s15, 0
    %p60 = por %p58, %p59
    %s61 = sadd.s32 %s16, %s17
    %p62 = scmp.lt.s32.totalorder %s61, 0
    %s63 = scalar_select %p62, %s61, 0
    %s64 = sadd.s32 %s28, %s24
    %p65 = scmp.lt.s32.totalorder %s64, 0
    %s66 = scalar_select %p65, %s64, 0
    %s67 = ssub.s32 %s63, %s66
    %p68 = scmp.eq.s32.totalorder %s67, 0
    %s70 = sadd.s32 %s69, 1
    %s71 = scalar_select %p68, %s69, %s70
    %p74 = pneg %p68
    %p75 = scmp.eq.s32.totalorder %s9, 1
    %p76 = por %p74, %p75
    %p77 = scmp.ne.s32.totalorder %s69, %s72
    %p78 = scmp.eq.s32.totalorder %s9, 0
    %p79 = por %p77, %p78
    %p80 = scmp.ne.s32.totalorder %s69, %s72
    %p81 = scmp.eq.s32.totalorder %s14, 1
    %p82 = por %p80, %p81
    %p83 = scmp.ne.s32.totalorder %s72, %s73
    %p84 = scmp.eq.s32.totalorder %s14, 0
    %p85 = por %p83, %p84
    %p86 = scmp.ne.s32.totalorder %s72, %s73
    %p87 = scmp.eq.s32.totalorder %s15, 1
    %p88 = por %p86, %p87
    %p90 = scmp.ne.s32.totalorder %s73, %s89
    %p91 = scmp.eq.s32.totalorder %s15, 0
    %p92 = por %p90, %p91
    %s93 = sadd.s32 %s16, %s17
    %p94 = scmp.lt.s32.totalorder %s93, 0
    %s95 = scalar_select %p94, %s93, 0
    %s96 = sadd.s32 %s28, %s24
    %p97 = scmp.lt.s32.totalorder %s96, 0
    %s98 = scalar_select %p97, %s96, 0
    %s99 = ssub.s32 %s95, %s98
    %p100 = scmp.eq.s32.totalorder %s99, 0
    %s102 = sadd.s32 %s101, 1
    %s103 = scalar_select %p100, %s101, %s102
    %p106 = pneg %p100
    %p107 = scmp.eq.s32.totalorder %s9, 1
    %p108 = por %p106, %p107
    %p109 = scmp.ne.s32.totalorder %s101, %s104
    %p110 = scmp.eq.s32.totalorder %s9, 0
    %p111 = por %p109, %p110
    %p112 = scmp.ne.s32.totalorder %s101, %s104
    %p113 = scmp.eq.s32.totalorder %s14, 1
    %p114 = por %p112, %p113
    %p115 = scmp.ne.s32.totalorder %s104, %s105
    %p116 = scmp.eq.s32.totalorder %s14, 0
    %p117 = por %p115, %p116
    %p118 = scmp.ne.s32.totalorder %s104, %s105
    %p119 = scmp.eq.s32.totalorder %s15, 1
    %p120 = por %p118, %p119
    %p122 = scmp.ne.s32.totalorder %s105, %s121
    %p123 = scmp.eq.s32.totalorder %s15, 0
    %p124 = por %p122, %p123
    %s125 = ssub.s32 %s16, %s28
    %p126 = scmp.eq.s32.totalorder %s125, 0
    %s128 = sadd.s32 %s127, 1
    %s129 = scalar_select %p126, %s127, %s128
    %p132 = pneg %p126
    %p133 = scmp.eq.s32.totalorder %s9, 1
    %p134 = por %p132, %p133
    %p135 = scmp.ne.s32.totalorder %s127, %s130
    %p136 = scmp.eq.s32.totalorder %s9, 0
    %p137 = por %p135, %p136
    %p138 = scmp.ne.s32.totalorder %s127, %s130
    %p139 = scmp.eq.s32.totalorder %s14, 1
    %p140 = por %p138, %p139
    %p141 = scmp.ne.s32.totalorder %s130, %s131
    %p142 = scmp.eq.s32.totalorder %s14, 0
    %p143 = por %p141, %p142
    %p144 = scmp.ne.s32.totalorder %s130, %s131
    %p145 = scmp.eq.s32.totalorder %s15, 1
    %p146 = por %p144, %p145
    %p148 = scmp.ne.s32.totalorder %s131, %s147
    %p149 = scmp.eq.s32.totalorder %s15, 0
    %p150 = por %p148, %p149
    %p151 = scmp.le.s32.totalorder 1, %s9
    %p152 = scmp.lt.s32.totalorder %s9, 3
    %p153 = pnand %p151, %p152
    %p154 = pneg %p153
    // Predicated region
    $region9: #{seg_focal_loss.1} parent=5 // pred_check
      _
    $region10: #{seg_focal_loss.1} parent=5 // pred_check_branch
      %156 = sbr.rel (%p153) target = $region12
    $region11: #{seg_focal_loss.1} parent=5 // pred_region
      %s157 = ssub.s32 %s9, 1
    $region12: #{seg_focal_loss.1} parent=5 // pred_fallthru
      _
    %p158 = scmp.lt.s32.totalorder %s9, 2
    // Predicated region
    $region13: #{seg_focal_loss.1} parent=5 // pred_check
      %p159 = pneg %p158
    $region14: #{seg_focal_loss.1} parent=5 // pred_check_branch
      %161 = sbr.rel (%p159) target = $region16
    $region15: #{seg_focal_loss.1} parent=5 // pred_region
      // Predicated region
      $region17: #{seg_focal_loss.1} parent=15 // pred_check
        %p162 = pneg %p47
      $region18: #{seg_focal_loss.1} parent=15 // pred_check_branch
        %164 = sbr.rel (%p162) target = $region20
      $region19: #{seg_focal_loss.1} parent=15 // pred_region
        %s165 = sadd.s32 %s16, %s17
        %p166 = scmp.lt.s32.totalorder %s165, 0
        %s167 = scalar_select %p166, %s165, 0
        %p168 = scmp.lt.s32.totalorder %s167, 0
        %s169 = scalar_select %p168, %s167, 0
        %s170 = smul.addr %s169, 8
        %s171 = smul.addr %s170, 8
        %s172 = scalar_lea.vmem %s0, %s171
        %s173 = sadd.s32 %s16, %s17
        %p174 = scmp.lt.s32.totalorder %s173, 0
        %s175 = scalar_select %p174, %s173, 0
      $region20: #{seg_focal_loss.1} parent=15 // pred_fallthru
        _
      // Predicated region
      $region21: #{seg_focal_loss.1} parent=15 // pred_check
        %p176 = pneg %p79
      $region22: #{seg_focal_loss.1} parent=15 // pred_check_branch
        %178 = sbr.rel (%p176) target = $region24
      $region23: #{seg_focal_loss.1} parent=15 // pred_region
        %s179 = sadd.s32 %s16, %s17
        %p180 = scmp.lt.s32.totalorder %s179, 0
        %s181 = scalar_select %p180, %s179, 0
        %p182 = scmp.lt.s32.totalorder %s181, 0
        %s183 = scalar_select %p182, %s181, 0
        %s184 = smul.addr %s183, 8
        %s185 = smul.addr %s184, 8
        %s186 = scalar_lea.vmem %s1, %s185
        %s187 = sadd.s32 %s16, %s17
        %p188 = scmp.lt.s32.totalorder %s187, 0
        %s189 = scalar_select %p188, %s187, 0
      $region24: #{seg_focal_loss.1} parent=15 // pred_fallthru
        _
      // Predicated region
      $region25: #{seg_focal_loss.1} parent=15 // pred_check
        %p190 = pneg %p111
      $region26: #{seg_focal_loss.1} parent=15 // pred_check_branch
        %192 = sbr.rel (%p190) target = $region28
      $region27: #{seg_focal_loss.1} parent=15 // pred_region
        %s193 = sadd.s32 %s16, %s17
        %p194 = scmp.lt.s32.totalorder %s193, 0
        %s195 = scalar_select %p194, %s193, 0
        %p196 = scmp.lt.s32.totalorder %s195, 0
        %s197 = scalar_select %p196, %s195, 0
        %s198 = smul.addr %s197, 8
        %s199 = scalar_lea.vmem %s2, %s198
        %s200 = sadd.s32 %s16, %s17
        %p201 = scmp.lt.s32.totalorder %s200, 0
        %s202 = scalar_select %p201, %s200, 0
      $region28: #{seg_focal_loss.1} parent=15 // pred_fallthru
        _
    $region16: #{seg_focal_loss.1} parent=5 // pred_fallthru
      _
    %p203 = scmp.le.s32.totalorder 1, %s9
    %p204 = scmp.lt.s32.totalorder %s9, 3
    %p205 = pnand %p203, %p204
    %p206 = pneg %p205
    // Predicated region
    $region29: #{seg_focal_loss.1} parent=5 // pred_check
      _
    $region30: #{seg_focal_loss.1} parent=5 // pred_check_branch
      %208 = sbr.rel (%p205) target = $region32
    $region31: #{seg_focal_loss.1} parent=5 // pred_region
      %s209 = ssub.s32 %s9, 1
      %s210 = sadd.s32 %s18, %s19
      %p211 = scmp.lt.s32.totalorder %s210, 0
      %s212 = scalar_select %p211, %s210, 0
      %p213 = scmp.lt.s32.totalorder %s212, 0
      %s214 = scalar_select %p213, %s212, 0
      %s215 = smul.addr %s214, 8
      %s216 = smul.addr %s215, 8
      %s217 = scalar_lea.vmem %s0, %s216
      %p218 = pneg %p53
      %p219 = pneg %p50
      %s220 = sadd.s32 %s18, %s19
      %p221 = scmp.lt.s32.totalorder %s220, 0
      %s222 = scalar_select %p221, %s220, 0
      %p223 = scmp.lt.s32.totalorder %s222, 0
      %s224 = scalar_select %p223, %s222, 0
      %s225 = smul.addr %s224, 8
      %s226 = smul.addr %s225, 8
      %s227 = scalar_lea.vmem %s1, %s226
      %p228 = pneg %p85
      %p229 = pneg %p82
      %s230 = sadd.s32 %s18, %s19
      %p231 = scmp.lt.s32.totalorder %s230, 0
      %s232 = scalar_select %p231, %s230, 0
      %p233 = scmp.lt.s32.totalorder %s232, 0
      %s234 = scalar_select %p233, %s232, 0
      %s235 = smul.addr %s234, 8
      %s236 = scalar_lea.vmem %s2, %s235
      %p237 = pneg %p117
      %p238 = pneg %p114
      %p239 = pneg %p143
      %p240 = pneg %p140
      %p241 = scmp.lt.s32.totalorder %s18, 1
      %s242 = scalar_select %p241, %s18, 1
      %s243 = smul.addr %s242, 8
      %s244 = smul.addr %s243, 8
      %s245 = scalar_lea.vmem %s3, %s244
      %s246 = sadd.s32 %s18, %s19
      %p247 = scmp.lt.s32.totalorder %s246, 0
      %s248 = scalar_select %p247, %s246, 0
      %p249 = scmp.lt.s32.totalorder %s248, 0
      %s250 = scalar_select %p249, %s248, 0
      %s251 = smul.addr %s250, 8
      %s252 = smul.addr %s251, 8
      %s253 = scalar_lea.vmem %s0, %s252
      %s254 = sadd.s32 %s18, %s19
      %p255 = scmp.lt.s32.totalorder %s254, 0
      %s256 = scalar_select %p255, %s254, 0
      %s257 = sadd.s32 %s18, %s19
      %p258 = scmp.lt.s32.totalorder %s257, 0
      %s259 = scalar_select %p258, %s257, 0
      %p260 = scmp.lt.s32.totalorder %s259, 0
      %s261 = scalar_select %p260, %s259, 0
      %s262 = smul.addr %s261, 8
      %s263 = smul.addr %s262, 8
      %s264 = scalar_lea.vmem %s1, %s263
      %s265 = sadd.s32 %s18, %s19
      %p266 = scmp.lt.s32.totalorder %s265, 0
      %s267 = scalar_select %p266, %s265, 0
      %s268 = sadd.s32 %s18, %s19
      %p269 = scmp.lt.s32.totalorder %s268, 0
      %s270 = scalar_select %p269, %s268, 0
      %p271 = scmp.lt.s32.totalorder %s270, 0
      %s272 = scalar_select %p271, %s270, 0
      %s273 = smul.addr %s272, 8
      %s274 = scalar_lea.vmem %s2, %s273
      %s275 = sadd.s32 %s18, %s19
      %p276 = scmp.lt.s32.totalorder %s275, 0
      %s277 = scalar_select %p276, %s275, 0
      %p278 = scmp.lt.s32.totalorder %s18, 1
      %s279 = scalar_select %p278, %s18, 1
      %s280 = smul.addr %s279, 8
      %s281 = smul.addr %s280, 8
      %s282 = scalar_lea.vmem %s3, %s281
      %p283 = scmp.eq.s32.totalorder %s19, 0
      // Predicated region
      $region33: #{seg_focal_loss.1} parent=31 // pred_check
        %p284 = pneg %p283
      $region34: #{seg_focal_loss.1} parent=31 // pred_check_branch
        %286 = sbr.rel (%p284) target = $region36
      $region35: #{seg_focal_loss.1} parent=31 // pred_region
        %287 = vst [vmem:[#allocation2] sm:$0xff] 0.0
        %288 = vst [vmem:[#allocation2 + $0x8] sm:$0xff] 0.0
        %289 = vst [vmem:[#allocation2 + $0x10] sm:$0xff] 0.0
        %290 = vst [vmem:[#allocation2 + $0x18] sm:$0xff] 0.0
        %291 = vst [vmem:[#allocation2 + $0x20] sm:$0xff] 0.0
        %292 = vst [vmem:[#allocation2 + $0x28] sm:$0xff] 0.0
        %293 = vst [vmem:[#allocation2 + $0x30] sm:$0xff] 0.0
        %294 = vst [vmem:[#allocation2 + $0x38] sm:$0xff] 0.0
      $region36: #{seg_focal_loss.1} parent=31 // pred_fallthru
        _
      %v295 = vld [vmem:[%s253] sm:$0xff]
      %v296 = vld [vmem:[%s253 + $0x8] sm:$0xff]
      %v297 = vld [vmem:[%s253 + $0x10] sm:$0xff]
      %v298 = vld [vmem:[%s253 + $0x18] sm:$0xff]
      %v299 = vld [vmem:[%s253 + $0x20] sm:$0xff]
      %v300 = vld [vmem:[%s253 + $0x28] sm:$0xff]
      %v301 = vld [vmem:[%s253 + $0x30] sm:$0xff]
      %v302 = vld [vmem:[%s253 + $0x38] sm:$0xff]
      %v303 = vmax.f32 %v295, 1e-05
      %v304 = vmax.f32 %v296, 1e-05
      %v305 = vmax.f32 %v297, 1e-05
      %v306 = vmax.f32 %v298, 1e-05
      %v307 = vmax.f32 %v299, 1e-05
      %v308 = vmax.f32 %v300, 1e-05
      %v309 = vmax.f32 %v301, 1e-05
      %v310 = vmax.f32 %v302, 1e-05
      %v311 = vmin.f32 %v303, 0.99999
      %v312 = vmin.f32 %v304, 0.99999
      %v313 = vmin.f32 %v305, 0.99999
      %v314 = vmin.f32 %v306, 0.99999
      %v315 = vmin.f32 %v307, 0.99999
      %v316 = vmin.f32 %v308, 0.99999
      %v317 = vmin.f32 %v309, 0.99999
      %v318 = vmin.f32 %v310, 0.99999
      %v319 = vld [vmem:[%s264] sm:$0xff]
      %v320 = vld [vmem:[%s264 + $0x8] sm:$0xff]
      %v321 = vld [vmem:[%s264 + $0x10] sm:$0xff]
      %v322 = vld [vmem:[%s264 + $0x18] sm:$0xff]
      %v323 = vld [vmem:[%s264 + $0x20] sm:$0xff]
      %v324 = vld [vmem:[%s264 + $0x28] sm:$0xff]
      %v325 = vld [vmem:[%s264 + $0x30] sm:$0xff]
      %v326 = vld [vmem:[%s264 + $0x38] sm:$0xff]
      %v327 = vsub.f32 1.0, %v311
      %v328 = vsub.f32 1.0, %v312
      %v329 = vsub.f32 1.0, %v313
      %v330 = vsub.f32 1.0, %v314
      %v331 = vsub.f32 1.0, %v315
      %v332 = vsub.f32 1.0, %v316
      %v333 = vsub.f32 1.0, %v317
      %v334 = vsub.f32 1.0, %v318
      %v335 = vmul.f32 %v311, %v311
      %v336 = vmul.f32 %v312, %v312
      %v337 = vmul.f32 %v313, %v313
      %v338 = vmul.f32 %v314, %v314
      %v339 = vmul.f32 %v315, %v315
      %v340 = vmul.f32 %v316, %v316
      %v341 = vmul.f32 %v317, %v317
      %v342 = vmul.f32 %v318, %v318
      %v343 = vmul.f32 %v327, %v327
      %v344 = vmul.f32 %v328, %v328
      %v345 = vmul.f32 %v329, %v329
      %v346 = vmul.f32 %v330, %v330
      %v347 = vmul.f32 %v331, %v331
      %v348 = vmul.f32 %v332, %v332
      %v349 = vmul.f32 %v333, %v333
      %v350 = vmul.f32 %v334, %v334
      %v351 = vmul.f32 %v343, -0.25
      %v352 = vmul.f32 %v344, -0.25
      %v353 = vmul.f32 %v345, -0.25
      %v354 = vmul.f32 %v346, -0.25
      %v355 = vmul.f32 %v347, -0.25
      %v356 = vmul.f32 %v348, -0.25
      %v357 = vmul.f32 %v349, -0.25
      %v358 = vmul.f32 %v350, -0.25
      %v359 = vmul.f32 %v351, %v319
      %v360 = vmul.f32 %v352, %v320
      %v361 = vmul.f32 %v353, %v321
      %v362 = vmul.f32 %v354, %v322
      %v363 = vmul.f32 %v355, %v323
      %v364 = vmul.f32 %v356, %v324
      %v365 = vmul.f32 %v357, %v325
      %v366 = vmul.f32 %v358, %v326
      %v367 = vlog2.pop %v311
      %v368 = vmul.f32 %v367, 0.6931472
      %v369 = vlog2.pop %v312
      %v370 = vmul.f32 %v369, 0.6931472
      %v371 = vlog2.pop %v313
      %v372 = vmul.f32 %v371, 0.6931472
      %v373 = vlog2.pop %v314
      %v374 = vmul.f32 %v373, 0.6931472
      %v375 = vlog2.pop %v315
      %v376 = vmul.f32 %v375, 0.6931472
      %v377 = vlog2.pop %v316
      %v378 = vmul.f32 %v377, 0.6931472
      %v379 = vlog2.pop %v317
      %v380 = vmul.f32 %v379, 0.6931472
      %v381 = vlog2.pop %v318
      %v382 = vmul.f32 %v381, 0.6931472
      %v383 = vmul.f32 %v359, %v368
      %v384 = vmul.f32 %v360, %v370
      %v385 = vmul.f32 %v361, %v372
      %v386 = vmul.f32 %v362, %v374
      %v387 = vmul.f32 %v363, %v376
      %v388 = vmul.f32 %v364, %v378
      %v389 = vmul.f32 %v365, %v380
      %v390 = vmul.f32 %v366, %v382
      %v391 = vmul.f32 %v335, 0.75
      %v392 = vmul.f32 %v336, 0.75
      %v393 = vmul.f32 %v337, 0.75
      %v394 = vmul.f32 %v338, 0.75
      %v395 = vmul.f32 %v339, 0.75
      %v396 = vmul.f32 %v340, 0.75
      %v397 = vmul.f32 %v341, 0.75
      %v398 = vmul.f32 %v342, 0.75
      %v399 = vsub.f32 1.0, %v319
      %v400 = vsub.f32 1.0, %v320
      %v401 = vsub.f32 1.0, %v321
      %v402 = vsub.f32 1.0, %v322
      %v403 = vsub.f32 1.0, %v323
      %v404 = vsub.f32 1.0, %v324
      %v405 = vsub.f32 1.0, %v325
      %v406 = vsub.f32 1.0, %v326
      %v407 = vmul.f32 %v391, %v399
      %v408 = vmul.f32 %v392, %v400
      %v409 = vmul.f32 %v393, %v401
      %v410 = vmul.f32 %v394, %v402
      %v411 = vmul.f32 %v395, %v403
      %v412 = vmul.f32 %v396, %v404
      %v413 = vmul.f32 %v397, %v405
      %v414 = vmul.f32 %v398, %v406
      %v415 = vlog2.pop %v327
      %v416 = vmul.f32 %v415, 0.6931472
      %v417 = vlog2.pop %v328
      %v418 = vmul.f32 %v417, 0.6931472
      %v419 = vlog2.pop %v329
      %v420 = vmul.f32 %v419, 0.6931472
      %v421 = vlog2.pop %v330
      %v422 = vmul.f32 %v421, 0.6931472
      %v423 = vlog2.pop %v331
      %v424 = vmul.f32 %v423, 0.6931472
      %v425 = vlog2.pop %v332
      %v426 = vmul.f32 %v425, 0.6931472
      %v427 = vlog2.pop %v333
      %v428 = vmul.f32 %v427, 0.6931472
      %v429 = vlog2.pop %v334
      %v430 = vmul.f32 %v429, 0.6931472
      %v431 = vmul.f32 %v407, %v416
      %v432 = vmul.f32 %v408, %v418
      %v433 = vmul.f32 %v409, %v420
      %v434 = vmul.f32 %v410, %v422
      %v435 = vmul.f32 %v411, %v424
      %v436 = vmul.f32 %v412, %v426
      %v437 = vmul.f32 %v413, %v428
      %v438 = vmul.f32 %v414, %v430
      %v439 = vsub.f32 %v383, %v431
      %v440 = vsub.f32 %v384, %v432
      %v441 = vsub.f32 %v385, %v433
      %v442 = vsub.f32 %v386, %v434
      %v443 = vsub.f32 %v387, %v435
      %v444 = vsub.f32 %v388, %v436
      %v445 = vsub.f32 %v389, %v437
      %v446 = vsub.f32 %v390, %v438
      %v447 = vld [vmem:[%s274] sm:$0xff]
      %449 = vset.pattern.permute.xlu0 0
      %450 = vperm.xlu0 %449, %v447
      %v451 = vpop.permute.xlu0 %450
      %v453 = vmul.f32 %v439, %v451
      %v454 = vmul.f32 %v440, %v451
      %v455 = vmul.f32 %v441, %v451
      %v456 = vmul.f32 %v442, %v451
      %v457 = vmul.f32 %v443, %v451
      %v458 = vmul.f32 %v444, %v451
      %v459 = vmul.f32 %v445, %v451
      %v460 = vmul.f32 %v446, %v451
      %s461 = sadd.s32 %s18, %s19
      %s462 = smul.u32 %s461, 8
      %v463 = vlaneseq
      %v464 = vshrl.u32 %v463, 7
      %v465 = vstv %s462
      %v466 = vadd.s32 %v465, %v464
      %vm467 = vcmp.lt.s32.totalorder %v466, 8
      %v468 = vsel %vm467, 1, 0
      %vm469 = vcmp.eq.s32.totalorder %v468, 1
      %v470 = vsel %vm469, %v453, 0.0
      %v471 = vsel %vm469, %v454, 0.0
      %v472 = vsel %vm469, %v455, 0.0
      %v473 = vsel %vm469, %v456, 0.0
      %v474 = vsel %vm469, %v457, 0.0
      %v475 = vsel %vm469, %v458, 0.0
      %v476 = vsel %vm469, %v459, 0.0
      %v477 = vsel %vm469, %v460, 0.0
      %v478 = vld [vmem:[#allocation2] sm:$0xff]
      %v479 = vld [vmem:[#allocation2 + $0x8] sm:$0xff]
      %v480 = vld [vmem:[#allocation2 + $0x10] sm:$0xff]
      %v481 = vld [vmem:[#allocation2 + $0x18] sm:$0xff]
      %v482 = vld [vmem:[#allocation2 + $0x20] sm:$0xff]
      %v483 = vld [vmem:[#allocation2 + $0x28] sm:$0xff]
      %v484 = vld [vmem:[#allocation2 + $0x30] sm:$0xff]
      %v485 = vld [vmem:[#allocation2 + $0x38] sm:$0xff]
      %v486 = vadd.f32 %v478, %v470
      %v487 = vadd.f32 %v479, %v471
      %v488 = vadd.f32 %v480, %v472
      %v489 = vadd.f32 %v481, %v473
      %v490 = vadd.f32 %v482, %v474
      %v491 = vadd.f32 %v483, %v475
      %v492 = vadd.f32 %v484, %v476
      %v493 = vadd.f32 %v485, %v477
      %494 = vst [vmem:[#allocation2] sm:$0xff] %v486
      %495 = vst [vmem:[#allocation2 + $0x8] sm:$0xff] %v487
      %496 = vst [vmem:[#allocation2 + $0x10] sm:$0xff] %v488
      %497 = vst [vmem:[#allocation2 + $0x18] sm:$0xff] %v489
      %498 = vst [vmem:[#allocation2 + $0x20] sm:$0xff] %v490
      %499 = vst [vmem:[#allocation2 + $0x28] sm:$0xff] %v491
      %500 = vst [vmem:[#allocation2 + $0x30] sm:$0xff] %v492
      %501 = vst [vmem:[#allocation2 + $0x38] sm:$0xff] %v493
      // Predicated region
      $region37: #{seg_focal_loss.1} parent=31 // pred_check
        %p502 = pneg %p283
      $region38: #{seg_focal_loss.1} parent=31 // pred_check_branch
        %504 = sbr.rel (%p502) target = $region40
      $region39: #{seg_focal_loss.1} parent=31 // pred_region
        %v505 = vld [vmem:[#allocation2] sm:$0xff]
        %v506 = vld [vmem:[#allocation2 + $0x8] sm:$0xff]
        %v507 = vld [vmem:[#allocation2 + $0x10] sm:$0xff]
        %v508 = vld [vmem:[#allocation2 + $0x18] sm:$0xff]
        %v509 = vld [vmem:[#allocation2 + $0x20] sm:$0xff]
        %v510 = vld [vmem:[#allocation2 + $0x28] sm:$0xff]
        %v511 = vld [vmem:[#allocation2 + $0x30] sm:$0xff]
        %v512 = vld [vmem:[#allocation2 + $0x38] sm:$0xff]
        %513 = vst [vmem:[%s282] sm:$0xff] %v505
        %514 = vst [vmem:[%s282 + $0x8] sm:$0xff] %v506
        %515 = vst [vmem:[%s282 + $0x10] sm:$0xff] %v507
        %516 = vst [vmem:[%s282 + $0x18] sm:$0xff] %v508
        %517 = vst [vmem:[%s282 + $0x20] sm:$0xff] %v509
        %518 = vst [vmem:[%s282 + $0x28] sm:$0xff] %v510
        %519 = vst [vmem:[%s282 + $0x30] sm:$0xff] %v511
        %520 = vst [vmem:[%s282 + $0x38] sm:$0xff] %v512
      $region40: #{seg_focal_loss.1} parent=31 // pred_fallthru
        _
      %p521 = scmp.lt.s32.totalorder %s18, 1
      %s522 = scalar_select %p521, %s18, 1
      %s523 = smul.addr %s522, 8
      %s524 = smul.addr %s523, 8
      %s525 = scalar_lea.vmem %s3, %s524
      // Predicated region
      $region41: #{seg_focal_loss.1} parent=31 // pred_check
        %p526 = pneg %p140
      $region42: #{seg_focal_loss.1} parent=31 // pred_check_branch
        %528 = sbr.rel (%p526) target = $region44
      $region43: #{seg_focal_loss.1} parent=31 // pred_region
        _
      $region44: #{seg_focal_loss.1} parent=31 // pred_fallthru
        _
    $region32: #{seg_focal_loss.1} parent=5 // pred_fallthru
      _
    %p529 = scmp.le.s32.totalorder 2, %s9
    // Predicated region
    $region45: #{seg_focal_loss.1} parent=5 // pred_check
      %p530 = pneg %p529
    $region46: #{seg_focal_loss.1} parent=5 // pred_check_branch
      %532 = sbr.rel (%p530) target = $region48
    $region47: #{seg_focal_loss.1} parent=5 // pred_region
      %s533 = ssub.s32 %s9, 2
      // Predicated region
      $region49: #{seg_focal_loss.1} parent=47 // pred_check
        %p534 = pneg %p146
      $region50: #{seg_focal_loss.1} parent=47 // pred_check_branch
        %536 = sbr.rel (%p534) target = $region52
      $region51: #{seg_focal_loss.1} parent=47 // pred_region
        %p537 = scmp.lt.s32.totalorder %s20, 1
        %s538 = scalar_select %p537, %s20, 1
        %s539 = smul.addr %s538, 8
        %s540 = smul.addr %s539, 8
        %s541 = scalar_lea.vmem %s3, %s540
      $region52: #{seg_focal_loss.1} parent=47 // pred_fallthru
        _
    $region48: #{seg_focal_loss.1} parent=5 // pred_fallthru
      _
  $region6: #{seg_focal_loss.1} parent=0 // loop_footer
    %s13 = sadd.s32 1, %s9
  $region7: #{seg_focal_loss.1} parent=0 // loop_footer_branch
    %8 = sbr.rel target = $region3
  $region8: #{seg_focal_loss.1} parent=0 // loop_exit
    _

</llo_original>
